<compile_context>
chip_gen: v5e
topology: v5e:2x2
jax: 0.10.0
libtpu: 0.0.40
codegen_flags: <defaults>
</compile_context>

<pallas_src>
import functools

import jax
import jax.numpy as jnp
from jax.experimental import pallas as pl
from jax.experimental.pallas import tpu as pltpu

LN_EPS = 1e-5  # torch.nn.LayerNorm default


def _round_up(x, m):
    return (x + m - 1) // m * m


def _vmem_capacity_bytes():
    try:
        return int(pltpu.get_tpu_info().vmem_capacity_bytes)
    except Exception:
        return 64 * 1024 * 1024  # conservative default (v7x per-core VMEM)


def addnorm_kernel(x_ref, y_ref, gamma_ref, beta_ref, out_ref, *, inv_d):
    """Residual add + LayerNorm over the last dim for one row tile.

    Statistics come from sum(z) and sum(z*z) with a precomputed 1/D, so
    zero-padded lanes do not affect them and only one lane-reduction pass per
    quantity is needed.
    """
    x = x_ref[...].astype(jnp.float32)          # (tile_rows, D_pad)
    y = y_ref[...].astype(jnp.float32)          # (tile_rows, D_pad)
    z = x + y                                   # residual add (dropout = identity, eval)

    s1 = jnp.sum(z, axis=-1, keepdims=True)
    s2 = jnp.sum(z * z, axis=-1, keepdims=True)
    mean = s1 * inv_d
    var = s2 * inv_d - mean * mean              # biased variance (matches PyTorch)
    inv_std = jax.lax.rsqrt(var + LN_EPS)

    gamma = gamma_ref[...].astype(jnp.float32)  # (1, D_pad), zero in padded lanes
    beta = beta_ref[...].astype(jnp.float32)    # (1, D_pad), zero in padded lanes
    out_ref[...] = ((z - mean) * inv_std * gamma + beta).astype(out_ref.dtype)


def _pick_tile_rows(rows, d_pad, itemsize):
    """Largest row tile that fits comfortably in this chip's VMEM."""
    vmem_bytes = _vmem_capacity_bytes()
    sub = 16 if itemsize == 2 else 8            # sublane packing granularity

    # 3 tiled streams (x, y, out), double-buffered by the pipeline, plus f32
    # working data inside the body.
    per_row_bytes = d_pad * (6 * itemsize + 2 * 4)
    budget = vmem_bytes * 5 // 8                # headroom for compiler scratch
    tile = min(budget // max(per_row_bytes, 1), 1024)
    tile = max((tile // sub) * sub, sub)

    rows_r = _round_up(rows, sub)
    if tile >= rows_r:
        # Whole problem fits in one tile; still prefer >=2 grid steps so v7x
        # can shard the "parallel" row axis across its two TensorCores.
        tile = _round_up(rows_r // 2, sub) if rows_r >= 2 * sub else rows_r
    return int(tile)


@functools.partial(jax.jit, static_argnames=("tile_rows",))
def addnorm_pallas(x, sublayer_out, gamma, beta, *, tile_rows=None):
    """x, sublayer_out: (B, S, D). gamma, beta: (D,). Returns (B, S, D)."""
    B, S, D = x.shape
    rows = B * S
    d_pad = _round_up(D, 128)                   # lane-dense feature dim
    itemsize = jnp.dtype(x.dtype).itemsize

    if tile_rows is None:
        tile_rows = _pick_tile_rows(rows, d_pad, itemsize)
    rows_pad = _round_up(rows, tile_rows)

    x2 = jnp.pad(x.reshape(rows, D), ((0, rows_pad - rows), (0, d_pad - D)))
    y2 = jnp.pad(sublayer_out.reshape(rows, D).astype(x.dtype),
                 ((0, rows_pad - rows), (0, d_pad - D)))
    g2 = jnp.pad(gamma, (0, d_pad - D)).reshape(1, d_pad)
    b2 = jnp.pad(beta, (0, d_pad - D)).reshape(1, d_pad)

    grid = (rows_pad // tile_rows,)

    # Raise the scoped-VMEM limit to cover the chosen (double-buffered) tiles.
    tile_bytes = tile_rows * d_pad * itemsize
    vmem_needed = 6 * tile_bytes + 2 * tile_rows * d_pad * 4 + (4 << 20)
    vmem_limit = int(min(max(vmem_needed, 32 << 20),
                         _vmem_capacity_bytes() * 9 // 10))

    kernel = functools.partial(addnorm_kernel, inv_d=1.0 / D)

    out = pl.pallas_call(
        kernel,
        out_shape=jax.ShapeDtypeStruct((rows_pad, d_pad), x.dtype),
        grid_spec=pltpu.PrefetchScalarGridSpec(
            num_scalar_prefetch=0,
            grid=grid,
            in_specs=[
                pl.BlockSpec((tile_rows, d_pad), lambda i: (i, 0)),
                pl.BlockSpec((tile_rows, d_pad), lambda i: (i, 0)),
                pl.BlockSpec((1, d_pad), lambda i: (0, 0)),
                pl.BlockSpec((1, d_pad), lambda i: (0, 0)),
            ],
            out_specs=pl.BlockSpec((tile_rows, d_pad), lambda i: (i, 0)),
        ),
        compiler_params=pltpu.CompilerParams(
            dimension_semantics=("parallel",),
            vmem_limit_bytes=vmem_limit,
        ),
    )(x2, y2, g2, b2)

    return out[:rows, :D].reshape(B, S, D)


def reference_addnorm(x, sublayer_out, gamma, beta):
    z = x.astype(jnp.float32) + sublayer_out.astype(jnp.float32)
    mean = jnp.mean(z, axis=-1, keepdims=True)
    var = jnp.mean((z - mean) ** 2, axis=-1, keepdims=True)
    return (z - mean) / jnp.sqrt(var + LN_EPS) * gamma + beta


if __name__ == "__main__":
    key = jax.random.PRNGKey(0)

    def run_case(batch, seq, model_dim, dtype, atol, rtol):
        k_x, k_w, k_b = jax.random.split(jax.random.fold_in(key, model_dim), 3)
        x = jax.random.normal(k_x, (batch, seq, model_dim), dtype=jnp.float32)

        # Deterministic "sublayer": a simple linear projection (plain-JAX glue).
        w = jax.random.normal(k_w, (model_dim, model_dim), dtype=jnp.float32) * 0.05
        b = jax.random.normal(k_b, (model_dim,), dtype=jnp.float32) * 0.01
        sublayer_out = jnp.einsum("bsd,de->bse", x, w) + b

        # LayerNorm parameters (PyTorch default init: weight=1, bias=0).
        gamma = jnp.ones((model_dim,), dtype=jnp.float32)
        beta = jnp.zeros((model_dim,), dtype=jnp.float32)

        x = x.astype(dtype)
        sublayer_out = sublayer_out.astype(dtype)

        out = addnorm_pallas(x, sublayer_out, gamma, beta)
        out = jax.block_until_ready(out)

        ref = reference_addnorm(x, sublayer_out, gamma, beta)
        assert out.shape == (batch, seq, model_dim)
        assert out.dtype == dtype
        assert jnp.allclose(out.astype(jnp.float32), ref, atol=atol, rtol=rtol), (
            f"mismatch vs reference (D={model_dim}, dtype={dtype})"
        )

    # Lane-dense case: model_dim multiple of 128, f32.
    run_case(batch=2, seq=8, model_dim=128, dtype=jnp.float32, atol=1e-4, rtol=1e-4)
    # Ragged case: D not a multiple of 128, rows not a multiple of the tile.
    run_case(batch=2, seq=7, model_dim=30, dtype=jnp.float32, atol=1e-4, rtol=1e-4)
    # bf16 I/O (f32 math inside the kernel).
    run_case(batch=2, seq=8, model_dim=128, dtype=jnp.bfloat16, atol=5e-2, rtol=5e-2)

    print("KERNEL_OK")
</pallas_src>

<mosaic_0001>
module attributes {stable_mosaic.version = 11 : i64} {
  func.func @addnorm_kernel(%arg0: i32, %arg1: memref<8x128xf32, #tpu.memory_space<vmem>>, %arg2: memref<8x128xf32, #tpu.memory_space<vmem>>, %arg3: memref<1x128xf32, #tpu.memory_space<vmem>>, %arg4: memref<1x128xf32, #tpu.memory_space<vmem>>, %arg5: memref<8x128xf32, #tpu.memory_space<vmem>>) attributes {dimension_semantics = [#tpu.dimension_semantics<parallel>], iteration_bounds = array<i64: 2>, scalar_prefetch = 0 : i64, scratch_operands = 0 : i64, tpu.core_type = #tpu.core_type<tc>, window_params = [{transform_indices = @transform_0, window_bounds = array<i64: 8, 128>}, {transform_indices = @transform_1, window_bounds = array<i64: 8, 128>}, {pipeline_mode = #tpu.pipeline_mode<synchronous>, transform_indices = @transform_2, window_bounds = array<i64: 1, 128>}, {pipeline_mode = #tpu.pipeline_mode<synchronous>, transform_indices = @transform_3, window_bounds = array<i64: 1, 128>}, {transform_indices = @transform_4, window_bounds = array<i64: 8, 128>}]} {
    %c0 = arith.constant 0 : index
    %c0_0 = arith.constant 0 : index
    %0 = vector.load %arg1[%c0, %c0_0] : memref<8x128xf32, #tpu.memory_space<vmem>>, vector<8x128xf32>
    %c0_1 = arith.constant 0 : index
    %c0_2 = arith.constant 0 : index
    %1 = vector.load %arg2[%c0_1, %c0_2] : memref<8x128xf32, #tpu.memory_space<vmem>>, vector<8x128xf32>
    %2 = arith.addf %0, %1 : vector<8x128xf32>
    %cst = arith.constant dense<0.000000e+00> : vector<8xf32>
    %3 = vector.multi_reduction <add>, %2, %cst [1] : vector<8x128xf32> to vector<8xf32>
    %4 = vector.shape_cast %3 : vector<8xf32> to vector<8x1xf32>
    %5 = arith.mulf %2, %2 : vector<8x128xf32>
    %cst_3 = arith.constant dense<0.000000e+00> : vector<8xf32>
    %6 = vector.multi_reduction <add>, %5, %cst_3 [1] : vector<8x128xf32> to vector<8xf32>
    %7 = vector.shape_cast %6 : vector<8xf32> to vector<8x1xf32>
    %cst_4 = arith.constant 7.812500e-03 : f32
    %8 = vector.broadcast %cst_4 : f32 to vector<8x1xf32>
    %9 = arith.mulf %4, %8 : vector<8x1xf32>
    %cst_5 = arith.constant 7.812500e-03 : f32
    %10 = vector.broadcast %cst_5 : f32 to vector<8x1xf32>
    %11 = arith.mulf %7, %10 : vector<8x1xf32>
    %12 = arith.mulf %9, %9 : vector<8x1xf32>
    %13 = arith.subf %11, %12 : vector<8x1xf32>
    %cst_6 = arith.constant 9.99999974E-6 : f32
    %14 = vector.broadcast %cst_6 : f32 to vector<8x1xf32>
    %15 = arith.addf %13, %14 : vector<8x1xf32>
    %16 = math.rsqrt %15 : vector<8x1xf32>
    %c0_7 = arith.constant 0 : index
    %c0_8 = arith.constant 0 : index
    %17 = vector.load %arg3[%c0_7, %c0_8] : memref<1x128xf32, #tpu.memory_space<vmem>>, vector<1x128xf32>
    %c0_9 = arith.constant 0 : index
    %c0_10 = arith.constant 0 : index
    %18 = vector.load %arg4[%c0_9, %c0_10] : memref<1x128xf32, #tpu.memory_space<vmem>>, vector<1x128xf32>
    %19 = vector.broadcast %9 : vector<8x1xf32> to vector<8x128xf32>
    %20 = arith.subf %2, %19 : vector<8x128xf32>
    %21 = vector.broadcast %16 : vector<8x1xf32> to vector<8x128xf32>
    %22 = arith.mulf %20, %21 : vector<8x128xf32>
    %23 = vector.broadcast %17 : vector<1x128xf32> to vector<8x128xf32>
    %24 = arith.mulf %22, %23 : vector<8x128xf32>
    %25 = vector.broadcast %18 : vector<1x128xf32> to vector<8x128xf32>
    %26 = arith.addf %24, %25 : vector<8x128xf32>
    %c0_11 = arith.constant 0 : index
    %c0_12 = arith.constant 0 : index
    %27 = vector.load %arg5[%c0_11, %c0_12] : memref<8x128xf32, #tpu.memory_space<vmem>>, vector<8x128xf32>
    tpu.vector_store %arg5[%c0_11, %c0_12], %26 {strides = array<i32>} : memref<8x128xf32, #tpu.memory_space<vmem>>, vector<8x128xf32>,
    return
  }
  func.func @transform_0(%arg0: i32) -> (i32, i32) {
    %c0_i32 = arith.constant 0 : i32
    %c0_i32_0 = arith.constant 0 : i32
    return %arg0, %c0_i32 : i32, i32
  }
  func.func @transform_1(%arg0: i32) -> (i32, i32) {
    %c0_i32 = arith.constant 0 : i32
    %c0_i32_0 = arith.constant 0 : i32
    return %arg0, %c0_i32 : i32, i32
  }
  func.func @transform_2(%arg0: i32) -> (i32, i32) {
    %c0_i32 = arith.constant 0 : i32
    %c0_i32_0 = arith.constant 0 : i32
    %c0_i32_1 = arith.constant 0 : i32
    return %c0_i32, %c0_i32_0 : i32, i32
  }
  func.func @transform_3(%arg0: i32) -> (i32, i32) {
    %c0_i32 = arith.constant 0 : i32
    %c0_i32_0 = arith.constant 0 : i32
    %c0_i32_1 = arith.constant 0 : i32
    return %c0_i32, %c0_i32_0 : i32, i32
  }
  func.func @transform_4(%arg0: i32) -> (i32, i32) {
    %c0_i32 = arith.constant 0 : i32
    %c0_i32_0 = arith.constant 0 : i32
    return %arg0, %c0_i32 : i32, i32
  }
}

</mosaic_0001>

<llo_original>
// kernel: addnorm_pallas.1
$region0: #{addnorm_pallas.1}
  #allocation0 [shape = 'u32[]', space=smem, size = 0x4, offset = 0x4, fixed_abs, tag = 'smem constant byte address 0x4 - core index']
  #allocation1 [shape = 'u32[72,128]{1,0:T(1,128)}', space=vmem, size = 0x9000, scoped, tag = 'internal scratch']
  %s0 = inlined_call_operand.hbm [shape: f32[16,128], index: 0, kind: input, shape index: {}]
  %s1 = inlined_call_operand.hbm [shape: f32[16,128], index: 1, kind: input, shape index: {}]
  %s2 = inlined_call_operand.vmem [shape: f32[1,128], index: 2, kind: input, shape index: {}]
  %s3 = inlined_call_operand.vmem [shape: f32[1,128], index: 3, kind: input, shape index: {}]
  %s4 = inlined_call_operand.hbm [shape: f32[16,128], index: 4, kind: output, shape index: {}]
  %s5 = sld [smem:[#allocation0]]
  $region57: #{addnorm_pallas.1} parent=0
    _
  %s7 = ssub.s32 1, %s5
  %s8 = scalar_select 0, %s7, %s5
  $region1: #{addnorm_pallas.1} parent=0
    #allocation2 [shape = 'u8[8192]{0}', space=vmem, size = 0x2000, scoped, tag = 'input window, operand 0']
    #allocation3 [shape = 's32[2]{0}', space=sflag, size = 0x8, scoped, tag = 'scoped memory for addnorm_pallas.1']
    #allocation4 [shape = 's32[2]{0}', space=sflag, size = 0x8, scoped, tag = 'scoped memory for addnorm_pallas.1']
    #allocation5 [shape = 'u8[8192]{0}', space=vmem, size = 0x2000, scoped, tag = 'input window, operand 1']
    #allocation6 [shape = 's32[2]{0}', space=sflag, size = 0x8, scoped, tag = 'scoped memory for addnorm_pallas.1']
    #allocation7 [shape = 'u8[8192]{0}', space=vmem, size = 0x2000, scoped, tag = 'output window, operand 0']
    %9 = vsyncpa [#allocation3], 0
    %s10 = scalar_lea.sflag [#allocation3], 1
    %11 = vsyncpa %s10, 0
    %12 = vsyncpa [#allocation6], 0
    %s13 = scalar_lea.sflag [#allocation6], 1
    %14 = vsyncpa %s13, 0
    %15 = vsyncpa [#allocation4], 0
    %s16 = scalar_lea.sflag [#allocation4], 1
    %17 = vsyncpa %s16, 0
    loop: start=0, step=1, limit=4
    $region2: #{addnorm_pallas.1} parent=1 // loop_pre_header
      _
    $region3: #{addnorm_pallas.1} parent=1 // loop_header
      %s19 = sphi 0, %s23
      %p20 = scmp.ge.s32.totalorder %s19, 4
      %s29 = sphi 0, %s31
      %s32 = sphi 0, %s29
      %s33 = sphi 0, %s32
      %s49 = sphi 0, %s33
      %s55 = sphi 0, %s57
      %s58 = sphi 0, %s55
      %s59 = sphi 0, %s58
      %s75 = sphi 0, %s59
      %s79 = sphi 0, %s79
      %s81 = sphi 0, %s79
      %s82 = sphi 0, %s81
      %s96 = sphi 0, %s82
      %s100 = sphi 0, %s100
      %s102 = sphi 0, %s100
      %s103 = sphi 0, %s102
      %s117 = sphi 0, %s103
      %s123 = sphi 0, %s125
      %s126 = sphi 0, %s123
      %s127 = sphi 0, %s126
      %s143 = sphi 0, %s127
    $region4: #{addnorm_pallas.1} parent=1 // loop_header_branch
      %22 = sbr.rel (%p20) target = $region8
    $region5: #{addnorm_pallas.1} parent=1 // loop_body
      %s24 = ssub.s32 %s19, 1
      %s25 = ssub.s32 %s19, 2
      %s26 = sadd.s32 %s19, 1
      %s27 = ssub.s32 %s19, %s26
      %p28 = scmp.eq.s32.totalorder %s27, 0
      %s30 = sadd.s32 %s29, 1
      %s31 = scalar_select %p28, %s29, %s30
      %p34 = pneg %p28
      %p35 = scmp.eq.s32.totalorder %s19, 1
      %p36 = por %p34, %p35
      %p37 = scmp.ne.s32.totalorder %s29, %s32
      %p38 = scmp.eq.s32.totalorder %s19, 0
      %p39 = por %p37, %p38
      %p40 = scmp.ne.s32.totalorder %s29, %s32
      %p41 = scmp.eq.s32.totalorder %s24, 1
      %p42 = por %p40, %p41
      %p43 = scmp.ne.s32.totalorder %s32, %s33
      %p44 = scmp.eq.s32.totalorder %s24, 0
      %p45 = por %p43, %p44
      %p46 = scmp.ne.s32.totalorder %s32, %s33
      %p47 = scmp.eq.s32.totalorder %s25, 1
      %p48 = por %p46, %p47
      %p50 = scmp.ne.s32.totalorder %s33, %s49
      %p51 = scmp.eq.s32.totalorder %s25, 0
      %p52 = por %p50, %p51
      %s53 = ssub.s32 %s19, %s26
      %p54 = scmp.eq.s32.totalorder %s53, 0
      %s56 = sadd.s32 %s55, 1
      %s57 = scalar_select %p54, %s55, %s56
      %p60 = pneg %p54
      %p61 = scmp.eq.s32.totalorder %s19, 1
      %p62 = por %p60, %p61
      %p63 = scmp.ne.s32.totalorder %s55, %s58
      %p64 = scmp.eq.s32.totalorder %s19, 0
      %p65 = por %p63, %p64
      %p66 = scmp.ne.s32.totalorder %s55, %s58
      %p67 = scmp.eq.s32.totalorder %s24, 1
      %p68 = por %p66, %p67
      %p69 = scmp.ne.s32.totalorder %s58, %s59
      %p70 = scmp.eq.s32.totalorder %s24, 0
      %p71 = por %p69, %p70
      %p72 = scmp.ne.s32.totalorder %s58, %s59
      %p73 = scmp.eq.s32.totalorder %s25, 1
      %p74 = por %p72, %p73
      %p76 = scmp.ne.s32.totalorder %s59, %s75
      %p77 = scmp.eq.s32.totalorder %s25, 0
      %p78 = por %p76, %p77
      %s80 = sadd.s32 %s79, 1
      %p83 = scmp.eq.s32.totalorder %s19, 1
      %p84 = scmp.ne.s32.totalorder %s79, %s81
      %p85 = scmp.eq.s32.totalorder %s19, 0
      %p86 = por %p84, %p85
      %p87 = scmp.ne.s32.totalorder %s79, %s81
      %p88 = scmp.eq.s32.totalorder %s24, 1
      %p89 = por %p87, %p88
      %p90 = scmp.ne.s32.totalorder %s81, %s82
      %p91 = scmp.eq.s32.totalorder %s24, 0
      %p92 = por %p90, %p91
      %p93 = scmp.ne.s32.totalorder %s81, %s82
      %p94 = scmp.eq.s32.totalorder %s25, 1
      %p95 = por %p93, %p94
      %p97 = scmp.ne.s32.totalorder %s82, %s96
      %p98 = scmp.eq.s32.totalorder %s25, 0
      %p99 = por %p97, %p98
      %s101 = sadd.s32 %s100, 1
      %p104 = scmp.eq.s32.totalorder %s19, 1
      %p105 = scmp.ne.s32.totalorder %s100, %s102
      %p106 = scmp.eq.s32.totalorder %s19, 0
      %p107 = por %p105, %p106
      %p108 = scmp.ne.s32.totalorder %s100, %s102
      %p109 = scmp.eq.s32.totalorder %s24, 1
      %p110 = por %p108, %p109
      %p111 = scmp.ne.s32.totalorder %s102, %s103
      %p112 = scmp.eq.s32.totalorder %s24, 0
      %p113 = por %p111, %p112
      %p114 = scmp.ne.s32.totalorder %s102, %s103
      %p115 = scmp.eq.s32.totalorder %s25, 1
      %p116 = por %p114, %p115
      %p118 = scmp.ne.s32.totalorder %s103, %s117
      %p119 = scmp.eq.s32.totalorder %s25, 0
      %p120 = por %p118, %p119
      %s121 = ssub.s32 %s19, %s26
      %p122 = scmp.eq.s32.totalorder %s121, 0
      %s124 = sadd.s32 %s123, 1
      %s125 = scalar_select %p122, %s123, %s124
      %p128 = pneg %p122
      %p129 = scmp.eq.s32.totalorder %s19, 1
      %p130 = por %p128, %p129
      %p131 = scmp.ne.s32.totalorder %s123, %s126
      %p132 = scmp.eq.s32.totalorder %s19, 0
      %p133 = por %p131, %p132
      %p134 = scmp.ne.s32.totalorder %s123, %s126
      %p135 = scmp.eq.s32.totalorder %s24, 1
      %p136 = por %p134, %p135
      %p137 = scmp.ne.s32.totalorder %s126, %s127
      %p138 = scmp.eq.s32.totalorder %s24, 0
      %p139 = por %p137, %p138
      %p140 = scmp.ne.s32.totalorder %s126, %s127
      %p141 = scmp.eq.s32.totalorder %s25, 1
      %p142 = por %p140, %p141
      %p144 = scmp.ne.s32.totalorder %s127, %s143
      %p145 = scmp.eq.s32.totalorder %s25, 0
      %p146 = por %p144, %p145
      %p147 = scmp.le.s32.totalorder 1, %s19
      %p148 = scmp.lt.s32.totalorder %s19, 3
      %p149 = pnand %p147, %p148
      %p150 = pneg %p149
      // Predicated region
      $region9: #{addnorm_pallas.1} parent=5 // pred_check
        _
      $region10: #{addnorm_pallas.1} parent=5 // pred_check_branch
        %152 = sbr.rel (%p149) target = $region12
      $region11: #{addnorm_pallas.1} parent=5 // pred_region
        %s153 = ssub.s32 %s19, 1
        // Predicated region
        $region13: #{addnorm_pallas.1} parent=11 // pred_check
          %p154 = pneg %p92
        $region14: #{addnorm_pallas.1} parent=11 // pred_check_branch
          %156 = sbr.rel (%p154) target = $region16
        $region15: #{addnorm_pallas.1} parent=11 // pred_region
          _
        $region16: #{addnorm_pallas.1} parent=11 // pred_fallthru
          _
        // Predicated region
        $region17: #{addnorm_pallas.1} parent=11 // pred_check
          %p157 = pneg %p113
        $region18: #{addnorm_pallas.1} parent=11 // pred_check_branch
          %159 = sbr.rel (%p157) target = $region20
        $region19: #{addnorm_pallas.1} parent=11 // pred_region
          _
        $region20: #{addnorm_pallas.1} parent=11 // pred_fallthru
          _
      $region12: #{addnorm_pallas.1} parent=5 // pred_fallthru
        _
      %p160 = scmp.lt.s32.totalorder %s19, 2
      // Predicated region
      $region21: #{addnorm_pallas.1} parent=5 // pred_check
        %p161 = pneg %p160
      $region22: #{addnorm_pallas.1} parent=5 // pred_check_branch
        %163 = sbr.rel (%p161) target = $region24
      $region23: #{addnorm_pallas.1} parent=5 // pred_region
        // Predicated region
        $region25: #{addnorm_pallas.1} parent=23 // pred_check
          %p164 = pneg %p39
        $region26: #{addnorm_pallas.1} parent=23 // pred_check_branch
          %166 = sbr.rel (%p164) target = $region28
        $region27: #{addnorm_pallas.1} parent=23 // pred_region
          %s167 = sand.u32 %s29, 1
          %s168 = scalar_lea.sflag [#allocation3], %s167
          %s169 = sand.u32 %s29, 1
          %s170 = smul.addr %s169, 8
          %s171 = scalar_lea.vmem [#allocation2], %s170
          %173 = vsyncadd %s168, 0
          %s174 = smul.addr %s19, 8
          %s175 = scalar_lea.hbm %s0, %s174
          %s177 = sshll.u32 %s175, 4
          %s178 = int_to_ptr.hbm [resolvable:$true] %s177
          %s179 = sshll.u32 %s171, 4
          %s180 = int_to_ptr.vmem [resolvable:$true] %s179
          %182 = dma.hbm_to_vmem [thread:$0]  %s178, 128, %s180, %s168
        $region28: #{addnorm_pallas.1} parent=23 // pred_fallthru
          _
        // Predicated region
        $region29: #{addnorm_pallas.1} parent=23 // pred_check
          %p183 = pneg %p65
        $region30: #{addnorm_pallas.1} parent=23 // pred_check_branch
          %185 = sbr.rel (%p183) target = $region32
        $region31: #{addnorm_pallas.1} parent=23 // pred_region
          %s186 = sand.u32 %s55, 1
          %s187 = scalar_lea.sflag [#allocation6], %s186
          %s188 = sand.u32 %s55, 1
          %s189 = smul.addr %s188, 8
          %s190 = scalar_lea.vmem [#allocation5], %s189
          %192 = vsyncadd %s187, 0
          %s193 = smul.addr %s19, 8
          %s194 = scalar_lea.hbm %s1, %s193
          %s196 = sshll.u32 %s194, 4
          %s197 = int_to_ptr.hbm [resolvable:$true] %s196
          %s198 = sshll.u32 %s190, 4
          %s199 = int_to_ptr.vmem [resolvable:$true] %s198
          %201 = dma.hbm_to_vmem [thread:$0]  %s197, 128, %s199, %s187
        $region32: #{addnorm_pallas.1} parent=23 // pred_fallthru
          _
      $region24: #{addnorm_pallas.1} parent=5 // pred_fallthru
        _
      %p202 = scmp.le.s32.totalorder 1, %s19
      %p203 = scmp.lt.s32.totalorder %s19, 3
      %p204 = pnand %p202, %p203
      %p205 = pneg %p204
      // Predicated region
      $region33: #{addnorm_pallas.1} parent=5 // pred_check
        _
      $region34: #{addnorm_pallas.1} parent=5 // pred_check_branch
        %207 = sbr.rel (%p204) target = $region36
      $region35: #{addnorm_pallas.1} parent=5 // pred_region
        %s208 = ssub.s32 %s19, 1
        %s209 = sand.u32 %s32, 1
        %s210 = scalar_lea.sflag [#allocation3], %s209
        %s211 = sand.u32 %s32, 1
        %s212 = smul.addr %s211, 8
        %s213 = scalar_lea.vmem [#allocation2], %s212
        // Predicated region
        $region37: #{addnorm_pallas.1} parent=35 // pred_check
          %p214 = pneg %p45
        $region38: #{addnorm_pallas.1} parent=35 // pred_check_branch
          %216 = sbr.rel (%p214) target = $region40
        $region39: #{addnorm_pallas.1} parent=35 // pred_region
          %218 = dma.done %s210, 128
        $region40: #{addnorm_pallas.1} parent=35 // pred_fallthru
          _
        %s219 = sand.u32 %s58, 1
        %s220 = scalar_lea.sflag [#allocation6], %s219
        %s221 = sand.u32 %s58, 1
        %s222 = smul.addr %s221, 8
        %s223 = scalar_lea.vmem [#allocation5], %s222
        // Predicated region
        $region41: #{addnorm_pallas.1} parent=35 // pred_check
          %p224 = pneg %p71
        $region42: #{addnorm_pallas.1} parent=35 // pred_check_branch
          %226 = sbr.rel (%p224) target = $region44
        $region43: #{addnorm_pallas.1} parent=35 // pred_region
          %228 = dma.done %s220, 128
        $region44: #{addnorm_pallas.1} parent=35 // pred_fallthru
          _
        %s229 = sand.u32 %s32, 1
        %s230 = scalar_lea.sflag [#allocation3], %s229
        %s231 = sand.u32 %s32, 1
        %s232 = smul.addr %s231, 8
        %s233 = scalar_lea.vmem [#allocation2], %s232
        %p234 = pneg %p45
        %p235 = pneg %p42
        %s236 = sand.u32 %s58, 1
        %s237 = scalar_lea.sflag [#allocation6], %s236
        %s238 = sand.u32 %s58, 1
        %s239 = smul.addr %s238, 8
        %s240 = scalar_lea.vmem [#allocation5], %s239
        %p241 = pneg %p71
        %p242 = pneg %p68
        %p243 = pneg %p92
        %p244 = pneg %p89
        %p245 = pneg %p113
        %p246 = pneg %p110
        %p247 = pneg %p139
        %p248 = pneg %p136
        %s249 = sand.u32 %s126, 1
        %s250 = scalar_lea.sflag [#allocation4], %s249
        %s251 = sand.u32 %s126, 1
        %s252 = smul.addr %s251, 8
        %s253 = scalar_lea.vmem [#allocation7], %s252
        %v254 = vld [vmem:[%s213] sm:$0xff]
        %v255 = vld [vmem:[%s223] sm:$0xff]
        %v256 = vadd.f32 %v254, %v255
        %257 = vadd.xlane.f32.xlu0 %v256
        %v258 = vpop.xlane.xlu0 %257
        %v259 = vmul.f32 %v256, %v256
        %260 = vadd.xlane.f32.xlu0 %v259
        %v261 = vpop.xlane.xlu0 %260
        %v262 = vmul.f32 %v258, 0.0078125
        %v263 = vmul.f32 %v261, 0.0078125
        %v264 = vmul.f32 %v262, %v262
        %v265 = vsub.f32 %v263, %v264
        %v266 = vadd.f32 %v265, 1e-05
        %v267 = vrsqrt.pop %v266
        %v268 = vmul.f32 %v267, %v266
        %v269 = vmul.f32 %v268, %v267
        %v270 = vmul.f32 0.5, %v269
        %v271 = vsub.f32 1.5, %v270
        %v272 = vmul.f32 %v267, %v271
        %vm273 = vweird.f32 %v266
        %vm274 = vweird.f32 %v267
        %vm275 = vmor %vm273, %vm274
        %v276 = vsel %vm275, %v267, %v272
        %v277 = vld [vmem:[%s2] sm:$0x1]
        %v278 = vld [vmem:[%s3] sm:$0x1]
        %v279 = vsub.f32 %v256, %v262
        %v280 = vmul.f32 %v279, %v276
        %v282 = vperm.slane %v277, 0
        %v284 = vmul.f32 %v280, %v282
        %v286 = vperm.slane %v278, 0
        %v288 = vadd.f32 %v284, %v286
        %289 = vst [vmem:[%s253] sm:$0xff] %v288
        %s290 = sand.u32 %s126, 1
        %s291 = scalar_lea.sflag [#allocation4], %s290
        %s292 = sand.u32 %s126, 1
        %s293 = smul.addr %s292, 8
        %s294 = scalar_lea.vmem [#allocation7], %s293
        // Predicated region
        $region45: #{addnorm_pallas.1} parent=35 // pred_check
          %p295 = pneg %p136
        $region46: #{addnorm_pallas.1} parent=35 // pred_check_branch
          %297 = sbr.rel (%p295) target = $region48
        $region47: #{addnorm_pallas.1} parent=35 // pred_region
          %299 = vsyncadd %s291, 0
          %s300 = smul.addr %s24, 8
          %s301 = scalar_lea.hbm %s4, %s300
          %s303 = sshll.u32 %s294, 4
          %s304 = int_to_ptr.vmem [resolvable:$true] %s303
          %s305 = sshll.u32 %s301, 4
          %s306 = int_to_ptr.hbm [resolvable:$true] %s305
          %308 = dma.vmem_to_hbm [thread:$0]  %s304, 128, %s306, %s291
        $region48: #{addnorm_pallas.1} parent=35 // pred_fallthru
          _
      $region36: #{addnorm_pallas.1} parent=5 // pred_fallthru
        _
      %p309 = scmp.le.s32.totalorder 2, %s19
      // Predicated region
      $region49: #{addnorm_pallas.1} parent=5 // pred_check
        %p310 = pneg %p309
      $region50: #{addnorm_pallas.1} parent=5 // pred_check_branch
        %312 = sbr.rel (%p310) target = $region52
      $region51: #{addnorm_pallas.1} parent=5 // pred_region
        %s313 = ssub.s32 %s19, 2
        // Predicated region
        $region53: #{addnorm_pallas.1} parent=51 // pred_check
          %p314 = pneg %p142
        $region54: #{addnorm_pallas.1} parent=51 // pred_check_branch
          %316 = sbr.rel (%p314) target = $region56
        $region55: #{addnorm_pallas.1} parent=51 // pred_region
          %s317 = sand.u32 %s127, 1
          %s318 = scalar_lea.sflag [#allocation4], %s317
          %s319 = sand.u32 %s127, 1
          %s320 = smul.addr %s319, 8
          %s321 = scalar_lea.vmem [#allocation7], %s320
          %323 = dma.done %s318, 128
        $region56: #{addnorm_pallas.1} parent=51 // pred_fallthru
          _
      $region52: #{addnorm_pallas.1} parent=5 // pred_fallthru
        _
    $region6: #{addnorm_pallas.1} parent=1 // loop_footer
      %s23 = sadd.s32 1, %s19
    $region7: #{addnorm_pallas.1} parent=1 // loop_footer_branch
      %18 = sbr.rel target = $region3
    $region8: #{addnorm_pallas.1} parent=1 // loop_exit
      _
    %324 = vsyncpa [#allocation3], 1
    %s325 = scalar_lea.sflag [#allocation3], 1
    %326 = vsyncpa %s325, 1
    %327 = vsyncpa [#allocation6], 1
    %s328 = scalar_lea.sflag [#allocation6], 1
    %329 = vsyncpa %s328, 1
    %330 = vsyncpa [#allocation4], 1
    %s331 = scalar_lea.sflag [#allocation4], 1
    %332 = vsyncpa %s331, 1

</llo_original>
